<compile_context>
chip_gen: v6e
topology: v6e:2x2x1
jax: 0.10.0
libtpu: 0.0.40
codegen_flags: <defaults>
</compile_context>

<pallas_src>
import jax
import jax.numpy as jnp
import numpy as np
from jax.experimental import pallas as pl
from jax.experimental.pallas import tpu as pltpu


# ---------------- configuration ----------------
BATCH = 64
IN_FEATURES = 32
EXPERT_HIDDEN = (64, 32)      # expert MLP hidden_units (Linear->ReLU, Linear->ReLU)
GATE_HIDDEN = (32,)           # gate MLP hidden_units   (Linear->ReLU)
NUM_EXPERT = 4
NUM_TASK = 2

F = IN_FEATURES
H1 = EXPERT_HIDDEN[0]
H2 = EXPERT_HIDDEN[1]
G1 = GATE_HIDDEN[0]
E = NUM_EXPERT
T = NUM_TASK
OUT_DIM = H2


def _round_up(n, m):
    return ((n + m - 1) // m) * m


# ---------------- derived packed-layout constants ----------------
EH1 = E * H1                          # 256  expert layer-1 output lanes
EH2 = E * H2                          # 128  expert feature lanes (expert-major)
TG1 = T * G1                          # 64   gate layer-1 output lanes (task-major)
TE = T * E                            # 8    packed per-task expert logits
K1 = _round_up(F + 1, 8)              # 40   x + ones column + zero pad (sublane aligned)
W1_W = EH1 + TG1                      # 320  fused L1 width (experts | gates)
W2C_W = _round_up(EH2 + TE, 128)      # 256  combined L2 width (feas | logits | pad)
OUT_W = _round_up(T * H2, 128)        # 128  lane-dense packed output width
EXP_W = TE * H2                       # 256  gate expansion width (task-major)
GM_W = EXP_W + OUT_W                  # 384  gate matrix width (expand | denom)
SLAB_W = max(W1_W, W2C_W, GM_W)       # 384  slab lane width

# slab row offsets (all multiples of 8)
R_W1 = 0
R_W2C = R_W1 + K1                     # 40
R_GATE = R_W2C + W1_W                 # 360
R_RED = R_GATE + _round_up(TE, 8)     # 368
R_BIAS = R_RED + EXP_W                # 624
SLAB_R = R_BIAS + 8                   # 632


# ---------------- Pallas kernel ----------------
def mmoe_kernel(x_ref, slab_ref, out_ref):
    # x_ref:    (TB, K1)       input with ones column (bias lane) + zero pad
    # slab_ref: (SLAB_R, SLAB_W) all weights/constants, resident across batch tiles
    # out_ref:  (TB, OUT_W)    packed per-task outputs, 128-lane dense
    x = x_ref[...]                                             # (TB, 40) f32

    w1 = slab_ref[R_W1:R_W1 + K1, 0:W1_W]                      # (40, 320)
    w2c = slab_ref[R_W2C:R_W2C + W1_W, 0:W2C_W]                # (320, 256)
    gate_m = slab_ref[R_GATE:R_GATE + TE, 0:GM_W]              # (8, 384)  [expand | denom]
    red_m = slab_ref[R_RED:R_RED + EXP_W, 0:OUT_W]             # (256, 128)
    eb2 = slab_ref[R_BIAS:R_BIAS + 1, 0:EH2]                   # (1, 128)
    gfb = slab_ref[R_BIAS:R_BIAS + 1, EH2:EH2 + TE]            # (1, 8)

    cdt = w1.dtype  # bf16 on the MXU-native path, f32 otherwise

    # ---- fused layer 1 for ALL experts and ALL gate MLPs (biases folded) ----
    h = jnp.dot(x.astype(cdt), w1, preferred_element_type=jnp.float32)   # (TB, 320)
    h = jnp.maximum(h, 0.0)

    # ---- combined layer 2: expert block-diag + gate-final block-diag, one matmul ----
    y = jnp.dot(h.astype(cdt), w2c, preferred_element_type=jnp.float32)  # (TB, 256)
    feas = jnp.maximum(y[:, 0:EH2] + eb2.astype(jnp.float32), 0.0)       # (TB, 128)
    logits = y[:, EH2:EH2 + TE] + gfb.astype(jnp.float32)                # (TB, 8)

    # ---- both task softmaxes, fused, lane-wide ----
    # subtracting the per-row global max is valid for every task group (same constant
    # within each group) and keeps exp() well-conditioned.
    p = jnp.exp(logits - jnp.max(logits, axis=-1, keepdims=True))        # (TB, 8)
    pd = jnp.dot(p.astype(cdt), gate_m, preferred_element_type=jnp.float32)  # (TB, 384)
    u_rep = pd[:, 0:EXP_W]                # (TB, 256) unnormalized gate, task-major lanes
    denom = pd[:, EXP_W:EXP_W + OUT_W]    # (TB, 128) per-task softmax denominator

    # ---- gate * expert_feas, reduced over experts with one block matmul ----
    feas_rep = jnp.concatenate([feas] * T, axis=1)                       # (TB, 256)
    weighted = u_rep * feas_rep                                          # (TB, 256)
    numer = jnp.dot(weighted.astype(cdt), red_m,
                    preferred_element_type=jnp.float32)                  # (TB, 128)

    # exact normalization (plain divide) for strict parity with the reference softmax;
    # padded output lanes are 0 / (positive guard) == 0.
    out_ref[...] = (numer / denom).astype(out_ref.dtype)


# ---------------- host-side parameter packing (one slab) ----------------
def pack_params(params, *, weight_dtype=jnp.float32):
    """Pack all weights + gating constants into one lane-dense (SLAB_R, SLAB_W) slab."""
    (ew1, eb1, ew2, eb2, gw1, gb1, gfw, gfb) = params
    assert ew1.shape == (E, F, H1) and ew2.shape == (E, H1, H2)
    assert gw1.shape == (T, F, G1) and gfw.shape == (T, G1, E)

    # layer 1 (experts | gates), biases folded into the ones-column row (row F)
    w1 = jnp.zeros((K1, W1_W), jnp.float32)
    w1 = w1.at[:F, :EH1].set(jnp.transpose(ew1, (1, 0, 2)).reshape(F, EH1))
    w1 = w1.at[F, :EH1].set(eb1.reshape(EH1))
    w1 = w1.at[:F, EH1:].set(jnp.transpose(gw1, (1, 0, 2)).reshape(F, TG1))
    w1 = w1.at[F, EH1:].set(gb1.reshape(TG1))

    # combined layer 2: expert block-diag (-> feas lanes) + gate-final block-diag (-> logit lanes)
    w2c = jnp.zeros((W1_W, W2C_W), jnp.float32)
    w2e_bd = jax.scipy.linalg.block_diag(*[ew2[e] for e in range(E)])   # (EH1, EH2)
    gf_bd = jax.scipy.linalg.block_diag(*[gfw[t] for t in range(T)])    # (TG1, TE)
    w2c = w2c.at[:EH1, :EH2].set(w2e_bd)
    w2c = w2c.at[EH1:, EH2:EH2 + TE].set(gf_bd)

    # gate matrix: [expand (TE -> TE*H2 task-major) | denom (TE -> per-task group sum)]
    expand_m = jnp.kron(jnp.eye(TE, dtype=jnp.float32),
                        jnp.ones((1, H2), jnp.float32))                 # (8, 256)
    denom_m = jnp.zeros((TE, OUT_W), jnp.float32)
    for t in range(T):
        denom_m = denom_m.at[t * E:(t + 1) * E, t * H2:(t + 1) * H2].set(1.0)
    denom_m = denom_m.at[0, T * H2:].set(1.0)   # guard padded lanes against 0/0
    gate_m = jnp.concatenate([expand_m, denom_m], axis=1)               # (8, 384)

    # reduce matrix: sum over experts within each task, padded to 128 output lanes (zeros)
    red_m = jnp.zeros((EXP_W, OUT_W), jnp.float32)
    blk = jnp.kron(jnp.ones((E, 1), jnp.float32), jnp.eye(H2, dtype=jnp.float32))  # (128, 32)
    for t in range(T):
        red_m = red_m.at[t * E * H2:(t + 1) * E * H2, t * H2:(t + 1) * H2].set(blk)

    slab = jnp.zeros((SLAB_R, SLAB_W), jnp.float32)
    slab = slab.at[R_W1:R_W1 + K1, 0:W1_W].set(w1)
    slab = slab.at[R_W2C:R_W2C + W1_W, 0:W2C_W].set(w2c)
    slab = slab.at[R_GATE:R_GATE + TE, 0:GM_W].set(gate_m)
    slab = slab.at[R_RED:R_RED + EXP_W, 0:OUT_W].set(red_m)
    slab = slab.at[R_BIAS, 0:EH2].set(eb2.reshape(EH2))
    slab = slab.at[R_BIAS, EH2:EH2 + TE].set(gfb.reshape(TE))
    return slab.astype(weight_dtype)


def _pick_batch_tile(B):
    """Largest tile <=512 dividing B, preferring >=2 grid steps (v7x has 2 TensorCores)."""
    best_single = None
    for tb in (512, 256, 128, 64, 32, 16, 8):
        if tb <= B and B % tb == 0:
            if B // tb >= 2:
                return tb
            if best_single is None:
                best_single = tb
    return best_single if best_single is not None else B


# ---------------- wrapper ----------------
def mmoe_forward(x, params, *, batch_tile=None, weight_dtype=jnp.float32):
    """Returns the MMoE per-task output list (length NUM_TASK, each (B, H2))."""
    slab = pack_params(params, weight_dtype=weight_dtype)
    B, f = x.shape
    assert f == F

    # ones column folds layer-1 biases into the L1 matmul; zero-pad K to a multiple of 8.
    x_aug = jnp.concatenate(
        [x, jnp.ones((B, 1), x.dtype), jnp.zeros((B, K1 - F - 1), x.dtype)], axis=1)

    tb = batch_tile if batch_tile is not None else _pick_batch_tile(B)
    assert B % tb == 0, "batch must be a multiple of the batch tile"
    grid = (B // tb,)

    in_specs = [
        pl.BlockSpec((tb, K1), lambda i: (i, 0)),
        pl.BlockSpec((SLAB_R, SLAB_W), lambda i: (0, 0)),   # weights resident across tiles
    ]
    out_spec = pl.BlockSpec((tb, OUT_W), lambda i: (i, 0))

    # advisory cost estimate so XLA can overlap this small kernel with neighbors
    flops = 2 * B * (K1 * W1_W + W1_W * W2C_W + TE * GM_W + EXP_W * OUT_W)
    bytes_accessed = int(x_aug.size * 4 + np.prod(slab.shape) * slab.dtype.itemsize
                         + B * OUT_W * 4)
    cost = pl.CostEstimate(flops=flops, transcendentals=B * TE,
                           bytes_accessed=bytes_accessed)

    out = pl.pallas_call(
        mmoe_kernel,
        out_shape=jax.ShapeDtypeStruct((B, OUT_W), jnp.float32),
        grid_spec=pltpu.PrefetchScalarGridSpec(
            num_scalar_prefetch=0,
            grid=grid,
            in_specs=in_specs,
            out_specs=out_spec,
        ),
        compiler_params=pltpu.CompilerParams(
            dimension_semantics=("parallel",),   # batch axis: sharded across TCs on v7x
        ),
        cost_estimate=cost,
    )(x_aug, slab)

    # MMoE.forward returns a list of per-task tensors; slice the packed lane-dense slab.
    return [out[:, t * H2:(t + 1) * H2] for t in range(T)]


# ---------------- deterministic parameter init ----------------
def init_params(key):
    ks = jax.random.split(key, 8)
    scale = 0.05
    ew1 = scale * jax.random.normal(ks[0], (E, F, H1), jnp.float32)
    eb1 = scale * jax.random.normal(ks[1], (E, 1, H1), jnp.float32)
    ew2 = scale * jax.random.normal(ks[2], (E, H1, H2), jnp.float32)
    eb2 = scale * jax.random.normal(ks[3], (E, 1, H2), jnp.float32)
    gw1 = scale * jax.random.normal(ks[4], (T, F, G1), jnp.float32)
    gb1 = scale * jax.random.normal(ks[5], (T, 1, G1), jnp.float32)
    gfw = scale * jax.random.normal(ks[6], (T, G1, E), jnp.float32)
    gfb = scale * jax.random.normal(ks[7], (T, 1, E), jnp.float32)
    return (ew1, eb1, ew2, eb2, gw1, gb1, gfw, gfb)


# ---------------- pure-JAX reference (correctness check) ----------------
def mmoe_reference(x, params):
    (ew1, eb1, ew2, eb2, gw1, gb1, gfw, gfb) = params
    expert_feas = []
    for e in range(E):
        h = jax.nn.relu(x @ ew1[e] + eb1[e])
        h = jax.nn.relu(h @ ew2[e] + eb2[e])
        expert_feas.append(h)
    expert_feas = jnp.stack(expert_feas, axis=1)               # (B, E, D)
    outs = []
    for t in range(T):
        g = jax.nn.relu(x @ gw1[t] + gb1[t])
        logits = g @ gfw[t] + gfb[t]
        gate = jax.nn.softmax(logits, axis=1)                  # (B, E)
        outs.append(jnp.einsum("be,bed->bd", gate, expert_feas))
    return outs


if __name__ == "__main__":
    key = jax.random.PRNGKey(0)
    kx, kp = jax.random.split(key)
    x = jax.random.normal(kx, (BATCH, IN_FEATURES), jnp.float32)
    params = init_params(kp)
    refs = mmoe_reference(x, params)

    # f32 weight path (exact-parity path, works on all TPU generations)
    outs = mmoe_forward(x, params)
    outs = [jax.block_until_ready(o) for o in outs]
    for o, r in zip(outs, refs):
        assert o.shape == (BATCH, OUT_DIM)
        assert jnp.allclose(o, r, atol=1e-3, rtol=1e-3), "f32 kernel mismatch vs reference"

    # bf16 weight path (MXU-native on v6e/v7x; f32 accumulation, f32 elementwise -> v5e safe)
    outs_bf16 = mmoe_forward(x, params, weight_dtype=jnp.bfloat16)
    outs_bf16 = [jax.block_until_ready(o) for o in outs_bf16]
    for o, r in zip(outs_bf16, refs):
        assert o.shape == (BATCH, OUT_DIM)
        assert jnp.allclose(o, r, atol=5e-3, rtol=5e-2), "bf16 kernel mismatch vs reference"

    print("KERNEL_OK")
</pallas_src>

<mosaic_0001>
module attributes {stable_mosaic.version = 11 : i64} {
  func.func @mmoe_kernel(%arg0: i32, %arg1: memref<32x40xf32, #tpu.memory_space<vmem>>, %arg2: memref<632x384xf32, #tpu.memory_space<vmem>>, %arg3: memref<32x128xf32, #tpu.memory_space<vmem>>) attributes {dimension_semantics = [#tpu.dimension_semantics<parallel>], iteration_bounds = array<i64: 2>, scalar_prefetch = 0 : i64, scratch_operands = 0 : i64, tpu.core_type = #tpu.core_type<tc>, window_params = [{transform_indices = @transform_0, window_bounds = array<i64: 32, 40>}, {pipeline_mode = #tpu.pipeline_mode<synchronous>, transform_indices = @transform_1, window_bounds = array<i64: 632, 384>}, {transform_indices = @transform_2, window_bounds = array<i64: 32, 128>}]} {
    %c0 = arith.constant 0 : index
    %c0_0 = arith.constant 0 : index
    %0 = vector.load %arg1[%c0, %c0_0] : memref<32x40xf32, #tpu.memory_space<vmem>>, vector<32x40xf32>
    %c0_1 = arith.constant 0 : index
    %c0_2 = arith.constant 0 : index
    %1 = vector.load %arg2[%c0_1, %c0_2] : memref<632x384xf32, #tpu.memory_space<vmem>>, vector<40x320xf32>
    %c40 = arith.constant 40 : index
    %c0_3 = arith.constant 0 : index
    %2 = vector.load %arg2[%c40, %c0_3] : memref<632x384xf32, #tpu.memory_space<vmem>>, vector<320x256xf32>
    %c360 = arith.constant 360 : index
    %c0_4 = arith.constant 0 : index
    %3 = vector.load %arg2[%c360, %c0_4] : memref<632x384xf32, #tpu.memory_space<vmem>>, vector<8x384xf32>
    %c368 = arith.constant 368 : index
    %c0_5 = arith.constant 0 : index
    %4 = vector.load %arg2[%c368, %c0_5] : memref<632x384xf32, #tpu.memory_space<vmem>>, vector<256x128xf32>
    %c624 = arith.constant 624 : index
    %c0_6 = arith.constant 0 : index
    %5 = vector.load %arg2[%c624, %c0_6] : memref<632x384xf32, #tpu.memory_space<vmem>>, vector<1x128xf32>
    %c624_7 = arith.constant 624 : index
    %c128 = arith.constant 128 : index
    %6 = vector.load %arg2[%c624_7, %c128] : memref<632x384xf32, #tpu.memory_space<vmem>>, vector<1x8xf32>
    %cst = arith.constant dense<0.000000e+00> : vector<32x320xf32>
    %7 = tpu.matmul %0, %1, %cst {dimension_numbers = #tpu.dot_dimension_numbers<[1], [0], [0], [1], [0, 0, 1, 1], [], []>} : vector<32x40xf32>, vector<40x320xf32>, vector<32x320xf32> -> vector<32x320xf32>
    %cst_8 = arith.constant 0.000000e+00 : f32
    %8 = vector.broadcast %cst_8 : f32 to vector<32x320xf32>
    %9 = arith.maximumf %7, %8 : vector<32x320xf32>
    %cst_9 = arith.constant dense<0.000000e+00> : vector<32x256xf32>
    %10 = tpu.matmul %9, %2, %cst_9 {dimension_numbers = #tpu.dot_dimension_numbers<[1], [0], [0], [1], [0, 0, 1, 1], [], []>} : vector<32x320xf32>, vector<320x256xf32>, vector<32x256xf32> -> vector<32x256xf32>
    %11 = vector.extract_strided_slice %10 {offsets = [0, 0], sizes = [32, 128], strides = [1, 1]} : vector<32x256xf32> to vector<32x128xf32>
    %12 = vector.broadcast %5 : vector<1x128xf32> to vector<32x128xf32>
    %13 = arith.addf %11, %12 : vector<32x128xf32>
    %cst_10 = arith.constant 0.000000e+00 : f32
    %14 = vector.broadcast %cst_10 : f32 to vector<32x128xf32>
    %15 = arith.maximumf %13, %14 : vector<32x128xf32>
    %16 = vector.extract_strided_slice %10 {offsets = [0, 128], sizes = [32, 8], strides = [1, 1]} : vector<32x256xf32> to vector<32x8xf32>
    %17 = vector.broadcast %6 : vector<1x8xf32> to vector<32x8xf32>
    %18 = arith.addf %16, %17 : vector<32x8xf32>
    %cst_11 = arith.constant dense<0xFF800000> : vector<32xf32>
    %19 = vector.multi_reduction <maximumf>, %18, %cst_11 [1] : vector<32x8xf32> to vector<32xf32>
    %20 = vector.shape_cast %19 : vector<32xf32> to vector<32x1xf32>
    %21 = vector.broadcast %20 : vector<32x1xf32> to vector<32x8xf32>
    %22 = arith.subf %18, %21 : vector<32x8xf32>
    %23 = math.exp %22 : vector<32x8xf32>
    %cst_12 = arith.constant dense<0.000000e+00> : vector<32x384xf32>
    %24 = tpu.matmul %23, %3, %cst_12 {dimension_numbers = #tpu.dot_dimension_numbers<[1], [0], [0], [1], [0, 0, 1, 1], [], []>} : vector<32x8xf32>, vector<8x384xf32>, vector<32x384xf32> -> vector<32x384xf32>
    %25 = vector.extract_strided_slice %24 {offsets = [0, 0], sizes = [32, 256], strides = [1, 1]} : vector<32x384xf32> to vector<32x256xf32>
    %26 = vector.extract_strided_slice %24 {offsets = [0, 256], sizes = [32, 128], strides = [1, 1]} : vector<32x384xf32> to vector<32x128xf32>
    %27 = tpu.concatenate %15, %15 in 1 : vector<32x128xf32>, vector<32x128xf32> -> vector<32x256xf32>
    %28 = arith.mulf %25, %27 : vector<32x256xf32>
    %cst_13 = arith.constant dense<0.000000e+00> : vector<32x128xf32>
    %29 = tpu.matmul %28, %4, %cst_13 {dimension_numbers = #tpu.dot_dimension_numbers<[1], [0], [0], [1], [0, 0, 1, 1], [], []>} : vector<32x256xf32>, vector<256x128xf32>, vector<32x128xf32> -> vector<32x128xf32>
    %30 = arith.divf %29, %26 : vector<32x128xf32>
    %c0_14 = arith.constant 0 : index
    %c0_15 = arith.constant 0 : index
    %31 = vector.load %arg3[%c0_14, %c0_15] : memref<32x128xf32, #tpu.memory_space<vmem>>, vector<32x128xf32>
    tpu.vector_store %arg3[%c0_14, %c0_15], %30 {strides = array<i32>} : memref<32x128xf32, #tpu.memory_space<vmem>>, vector<32x128xf32>,
    return
  }
  func.func @transform_0(%arg0: i32) -> (i32, i32) {
    %c0_i32 = arith.constant 0 : i32
    %c0_i32_0 = arith.constant 0 : i32
    return %arg0, %c0_i32 : i32, i32
  }
  func.func @transform_1(%arg0: i32) -> (i32, i32) {
    %c0_i32 = arith.constant 0 : i32
    %c0_i32_0 = arith.constant 0 : i32
    %c0_i32_1 = arith.constant 0 : i32
    return %c0_i32, %c0_i32_0 : i32, i32
  }
  func.func @transform_2(%arg0: i32) -> (i32, i32) {
    %c0_i32 = arith.constant 0 : i32
    %c0_i32_0 = arith.constant 0 : i32
    return %arg0, %c0_i32 : i32, i32
  }
}

</mosaic_0001>

<llo_original>
// kernel: tpu_custom_call.1
$region0: #{tpu_custom_call.1}
  #allocation0 [shape = 'u32[]', space=smem, size = 0x4, offset = 0x4, fixed_abs, tag = 'smem constant byte address 0x4 - core index']
  #allocation1 [shape = 'u32[144,128]{1,0:T(1,128)}', space=vmem, size = 0x12000, scoped, tag = 'internal scratch']
  %s0 = inlined_call_operand.vmem [shape: f32[64,40], index: 0, kind: input, shape index: {}]
  %s1 = inlined_call_operand.hbm [shape: f32[632,384], index: 1, kind: input, shape index: {}]
  %s2 = inlined_call_operand.hbm [shape: f32[64,128], index: 2, kind: output, shape index: {}]
  %s3 = sld [smem:[#allocation0]]
  $region45: #{tpu_custom_call.1} parent=0
    _
  %s5 = ssub.s32 1, %s3
  %s6 = scalar_select 0, %s5, %s3
  $region1: #{tpu_custom_call.1} parent=0
    #allocation2 [shape = 'u8[970752]{0}', space=vmem, size = 0xed000, scoped, tag = 'input window, operand 1, single buffered']
    #allocation3 [shape = 's32[2]{0}', space=sflag, size = 0x8, scoped, tag = 'scoped memory for tpu_custom_call.1']
    #allocation4 [shape = 's32[2]{0}', space=sflag, size = 0x8, scoped, tag = 'scoped memory for tpu_custom_call.1']
    #allocation5 [shape = 'u8[32768]{0}', space=vmem, size = 0x8000, scoped, tag = 'output window, operand 0']
    %7 = vsyncpa [#allocation3], 0
    %8 = vsyncpa [#allocation4], 0
    %s9 = scalar_lea.sflag [#allocation4], 1
    %10 = vsyncpa %s9, 0
    loop: start=0, step=1, limit=4
    $region2: #{tpu_custom_call.1} parent=1 // loop_pre_header
      _
    $region3: #{tpu_custom_call.1} parent=1 // loop_header
      %s12 = sphi 0, %s16
      %p13 = scmp.ge.s32.totalorder %s12, 4
      %s22 = sphi 0, %s24
      %s25 = sphi 0, %s22
      %s26 = sphi 0, %s25
      %s42 = sphi 0, %s26
      %s46 = sphi 0, %s46
      %s48 = sphi 0, %s46
      %s49 = sphi 0, %s48
      %s63 = sphi 0, %s49
      %s69 = sphi 0, %s71
      %s72 = sphi 0, %s69
      %s73 = sphi 0, %s72
      %s89 = sphi 0, %s73
    $region4: #{tpu_custom_call.1} parent=1 // loop_header_branch
      %15 = sbr.rel (%p13) target = $region8
    $region5: #{tpu_custom_call.1} parent=1 // loop_body
      %s17 = ssub.s32 %s12, 1
      %s18 = ssub.s32 %s12, 2
      %s19 = sadd.s32 %s12, 1
      %s20 = ssub.s32 %s12, %s19
      %p21 = scmp.eq.s32.totalorder %s20, 0
      %s23 = sadd.s32 %s22, 1
      %s24 = scalar_select %p21, %s22, %s23
      %p27 = pneg %p21
      %p28 = scmp.eq.s32.totalorder %s12, 1
      %p29 = por %p27, %p28
      %p30 = scmp.ne.s32.totalorder %s22, %s25
      %p31 = scmp.eq.s32.totalorder %s12, 0
      %p32 = por %p30, %p31
      %p33 = scmp.ne.s32.totalorder %s22, %s25
      %p34 = scmp.eq.s32.totalorder %s17, 1
      %p35 = por %p33, %p34
      %p36 = scmp.ne.s32.totalorder %s25, %s26
      %p37 = scmp.eq.s32.totalorder %s17, 0
      %p38 = por %p36, %p37
      %p39 = scmp.ne.s32.totalorder %s25, %s26
      %p40 = scmp.eq.s32.totalorder %s18, 1
      %p41 = por %p39, %p40
      %p43 = scmp.ne.s32.totalorder %s26, %s42
      %p44 = scmp.eq.s32.totalorder %s18, 0
      %p45 = por %p43, %p44
      %s47 = sadd.s32 %s46, 1
      %p50 = scmp.eq.s32.totalorder %s12, 1
      %p51 = scmp.ne.s32.totalorder %s46, %s48
      %p52 = scmp.eq.s32.totalorder %s12, 0
      %p53 = por %p51, %p52
      %p54 = scmp.ne.s32.totalorder %s46, %s48
      %p55 = scmp.eq.s32.totalorder %s17, 1
      %p56 = por %p54, %p55
      %p57 = scmp.ne.s32.totalorder %s48, %s49
      %p58 = scmp.eq.s32.totalorder %s17, 0
      %p59 = por %p57, %p58
      %p60 = scmp.ne.s32.totalorder %s48, %s49
      %p61 = scmp.eq.s32.totalorder %s18, 1
      %p62 = por %p60, %p61
      %p64 = scmp.ne.s32.totalorder %s49, %s63
      %p65 = scmp.eq.s32.totalorder %s18, 0
      %p66 = por %p64, %p65
      %s67 = ssub.s32 %s12, %s19
      %p68 = scmp.eq.s32.totalorder %s67, 0
      %s70 = sadd.s32 %s69, 1
      %s71 = scalar_select %p68, %s69, %s70
      %p74 = pneg %p68
      %p75 = scmp.eq.s32.totalorder %s12, 1
      %p76 = por %p74, %p75
      %p77 = scmp.ne.s32.totalorder %s69, %s72
      %p78 = scmp.eq.s32.totalorder %s12, 0
      %p79 = por %p77, %p78
      %p80 = scmp.ne.s32.totalorder %s69, %s72
      %p81 = scmp.eq.s32.totalorder %s17, 1
      %p82 = por %p80, %p81
      %p83 = scmp.ne.s32.totalorder %s72, %s73
      %p84 = scmp.eq.s32.totalorder %s17, 0
      %p85 = por %p83, %p84
      %p86 = scmp.ne.s32.totalorder %s72, %s73
      %p87 = scmp.eq.s32.totalorder %s18, 1
      %p88 = por %p86, %p87
      %p90 = scmp.ne.s32.totalorder %s73, %s89
      %p91 = scmp.eq.s32.totalorder %s18, 0
      %p92 = por %p90, %p91
      %p93 = scmp.le.s32.totalorder 1, %s12
      %p94 = scmp.lt.s32.totalorder %s12, 3
      %p95 = pnand %p93, %p94
      %p96 = pneg %p95
      // Predicated region
      $region9: #{tpu_custom_call.1} parent=5 // pred_check
        _
      $region10: #{tpu_custom_call.1} parent=5 // pred_check_branch
        %98 = sbr.rel (%p95) target = $region12
      $region11: #{tpu_custom_call.1} parent=5 // pred_region
        %s99 = ssub.s32 %s12, 1
        // Predicated region
        $region13: #{tpu_custom_call.1} parent=11 // pred_check
          %p100 = pneg %p59
        $region14: #{tpu_custom_call.1} parent=11 // pred_check_branch
          %102 = sbr.rel (%p100) target = $region16
        $region15: #{tpu_custom_call.1} parent=11 // pred_region
          %s104 = ssub.s32 30336, 30336
          %105 = vsyncadd [#allocation3], %s104
          %s106 = sshll.u32 [#allocation2], 4
          %s107 = int_to_ptr.vmem [resolvable:$true] %s106
          %112 = dma.hbm_to_vmem [thread:$0]  %s1, 30336, %s107, [#allocation3], 384, 384, 24
        $region16: #{tpu_custom_call.1} parent=11 // pred_fallthru
          _
      $region12: #{tpu_custom_call.1} parent=5 // pred_fallthru
        _
      %p113 = scmp.lt.s32.totalorder %s12, 2
      // Predicated region
      $region17: #{tpu_custom_call.1} parent=5 // pred_check
        %p114 = pneg %p113
      $region18: #{tpu_custom_call.1} parent=5 // pred_check_branch
        %116 = sbr.rel (%p114) target = $region20
      $region19: #{tpu_custom_call.1} parent=5 // pred_region
        // Predicated region
        $region21: #{tpu_custom_call.1} parent=19 // pred_check
          %p117 = pneg %p32
        $region22: #{tpu_custom_call.1} parent=19 // pred_check_branch
          %119 = sbr.rel (%p117) target = $region24
        $region23: #{tpu_custom_call.1} parent=19 // pred_region
          %s120 = smul.u32 4, %s12
          %p121 = scmp.lt.s32.totalorder %s120, 7
          %s122 = scalar_select %p121, %s120, 7
          %s123 = smul.addr %s122, 8
          %s124 = scalar_lea.vmem %s0, %s123
          %s125 = smul.u32 4, %s12
        $region24: #{tpu_custom_call.1} parent=19 // pred_fallthru
          _
      $region20: #{tpu_custom_call.1} parent=5 // pred_fallthru
        _
      %p126 = scmp.le.s32.totalorder 1, %s12
      %p127 = scmp.lt.s32.totalorder %s12, 3
      %p128 = pnand %p126, %p127
      %p129 = pneg %p128
      // Predicated region
      $region25: #{tpu_custom_call.1} parent=5 // pred_check
        _
      $region26: #{tpu_custom_call.1} parent=5 // pred_check_branch
        %131 = sbr.rel (%p128) target = $region28
      $region27: #{tpu_custom_call.1} parent=5 // pred_region
        %s132 = ssub.s32 %s12, 1
        // Predicated region
        $region29: #{tpu_custom_call.1} parent=27 // pred_check
          %p133 = pneg %p59
        $region30: #{tpu_custom_call.1} parent=27 // pred_check_branch
          %135 = sbr.rel (%p133) target = $region32
        $region31: #{tpu_custom_call.1} parent=27 // pred_region
          %136 = dma.done [#allocation3], 30336
        $region32: #{tpu_custom_call.1} parent=27 // pred_fallthru
          _
        %s137 = smul.u32 4, %s17
        %p138 = scmp.lt.s32.totalorder %s137, 7
        %s139 = scalar_select %p138, %s137, 7
        %s140 = smul.addr %s139, 8
        %s141 = scalar_lea.vmem %s0, %s140
        %p142 = pneg %p38
        %p143 = pneg %p35
        %p144 = pneg %p59
        %p145 = pneg %p56
        %p146 = pneg %p85
        %p147 = pneg %p82
        %s148 = sand.u32 %s72, 1
        %s149 = scalar_lea.sflag [#allocation4], %s148
        %s150 = sand.u32 %s72, 1
        %s151 = smul.addr %s150, 32
        %s152 = scalar_lea.vmem [#allocation5], %s151
        %s153 = smul.u32 4, %s17
        %p154 = scmp.lt.s32.totalorder %s153, 7
        %s155 = scalar_select %p154, %s153, 7
        %s156 = smul.addr %s155, 8
        %s157 = scalar_lea.vmem %s0, %s156
        %s158 = smul.u32 4, %s17
        %s159 = smul.u32 4, %s17
        %v160 = vld [vmem:[%s157] sm:$0xff]
        %v161 = vld [vmem:[%s157 + $0x8] sm:$0xff]
        %v162 = vld [vmem:[%s157 + $0x10] sm:$0xff]
        %v163 = vld [vmem:[%s157 + $0x18] sm:$0xff]
        %v164 = vld [vmem:[#allocation2] sm:$0xff]
        %v165 = vld [vmem:[#allocation2 + $0x8] sm:$0xff]
        %v166 = vld [vmem:[#allocation2 + $0x10] sm:$0xff]
        %v167 = vld [vmem:[#allocation2 + $0x18] sm:$0xff]
        %v168 = vld [vmem:[#allocation2 + $0x20] sm:$0xff]
        %v169 = vld [vmem:[#allocation2 + $0x28] sm:$0xff]
        %v170 = vld [vmem:[#allocation2 + $0x30] sm:$0xff]
        %v171 = vld [vmem:[#allocation2 + $0x38] sm:$0xff]
        %v172 = vld [vmem:[#allocation2 + $0x40] sm:$0xff]
        %v173 = vld [vmem:[#allocation2 + $0x48] sm:$0xff]
        %v174 = vld [vmem:[#allocation2 + $0x50] sm:$0xff]
        %v175 = vld [vmem:[#allocation2 + $0x58] sm:$0xff]
        %v176 = vld [vmem:[#allocation2 + $0x60] sm:$0xff]
        %v177 = vld [vmem:[#allocation2 + $0x68] sm:$0xff]
        %v178 = vld [vmem:[#allocation2 + $0x70] sm:$0xff]
        %v179 = vld [vmem:[#allocation2 + $0x78] sm:$0xff]
        %v180 = vld [vmem:[#allocation2 + $0x80] sm:$0xff]
        %v181 = vld [vmem:[#allocation2 + $0x90] sm:$0xff]
        %v182 = vld [vmem:[#allocation2 + $0x98] sm:$0xff]
        %v183 = vld [vmem:[#allocation2 + $0xa8] sm:$0xff]
        %v184 = vld [vmem:[#allocation2 + $0xb0] sm:$0xff]
        %v185 = vld [vmem:[#allocation2 + $0xc0] sm:$0xff]
        %v186 = vld [vmem:[#allocation2 + $0xc8] sm:$0xff]
        %v187 = vld [vmem:[#allocation2 + $0xd8] sm:$0xff]
        %v188 = vld [vmem:[#allocation2 + $0xe0] sm:$0xff]
        %v189 = vld [vmem:[#allocation2 + $0xf0] sm:$0xff]
        %v190 = vld [vmem:[#allocation2 + $0xf8] sm:$0xff]
        %v191 = vld [vmem:[#allocation2 + $0x108] sm:$0xff]
        %v192 = vld [vmem:[#allocation2 + $0x110] sm:$0xff]
        %v193 = vld [vmem:[#allocation2 + $0x120] sm:$0xff]
        %v194 = vld [vmem:[#allocation2 + $0x128] sm:$0xff]
        %v195 = vld [vmem:[#allocation2 + $0x138] sm:$0xff]
        %v196 = vld [vmem:[#allocation2 + $0x140] sm:$0xff]
        %v197 = vld [vmem:[#allocation2 + $0x150] sm:$0xff]
        %v198 = vld [vmem:[#allocation2 + $0x158] sm:$0xff]
        %v199 = vld [vmem:[#allocation2 + $0x168] sm:$0xff]
        %v200 = vld [vmem:[#allocation2 + $0x170] sm:$0xff]
        %v201 = vld [vmem:[#allocation2 + $0x180] sm:$0xff]
        %v202 = vld [vmem:[#allocation2 + $0x188] sm:$0xff]
        %v203 = vld [vmem:[#allocation2 + $0x198] sm:$0xff]
        %v204 = vld [vmem:[#allocation2 + $0x1a0] sm:$0xff]
        %v205 = vld [vmem:[#allocation2 + $0x1b0] sm:$0xff]
        %v206 = vld [vmem:[#allocation2 + $0x1b8] sm:$0xff]
        %v207 = vld [vmem:[#allocation2 + $0x1c8] sm:$0xff]
        %v208 = vld [vmem:[#allocation2 + $0x1d0] sm:$0xff]
        %v209 = vld [vmem:[#allocation2 + $0x1e0] sm:$0xff]
        %v210 = vld [vmem:[#allocation2 + $0x1e8] sm:$0xff]
        %v211 = vld [vmem:[#allocation2 + $0x1f8] sm:$0xff]
        %v212 = vld [vmem:[#allocation2 + $0x200] sm:$0xff]
        %v213 = vld [vmem:[#allocation2 + $0x210] sm:$0xff]
        %v214 = vld [vmem:[#allocation2 + $0x218] sm:$0xff]
        %v215 = vld [vmem:[#allocation2 + $0x228] sm:$0xff]
        %v216 = vld [vmem:[#allocation2 + $0x230] sm:$0xff]
        %v217 = vld [vmem:[#allocation2 + $0x240] sm:$0xff]
        %v218 = vld [vmem:[#allocation2 + $0x248] sm:$0xff]
        %v219 = vld [vmem:[#allocation2 + $0x258] sm:$0xff]
        %v220 = vld [vmem:[#allocation2 + $0x260] sm:$0xff]
        %v221 = vld [vmem:[#allocation2 + $0x270] sm:$0xff]
        %v222 = vld [vmem:[#allocation2 + $0x278] sm:$0xff]
        %v223 = vld [vmem:[#allocation2 + $0x288] sm:$0xff]
        %v224 = vld [vmem:[#allocation2 + $0x290] sm:$0xff]
        %v225 = vld [vmem:[#allocation2 + $0x2a0] sm:$0xff]
        %v226 = vld [vmem:[#allocation2 + $0x2a8] sm:$0xff]
        %v227 = vld [vmem:[#allocation2 + $0x2b8] sm:$0xff]
        %v228 = vld [vmem:[#allocation2 + $0x2c0] sm:$0xff]
        %v229 = vld [vmem:[#allocation2 + $0x2d0] sm:$0xff]
        %v230 = vld [vmem:[#allocation2 + $0x2d8] sm:$0xff]
        %v231 = vld [vmem:[#allocation2 + $0x2e8] sm:$0xff]
        %v232 = vld [vmem:[#allocation2 + $0x2f0] sm:$0xff]
        %v233 = vld [vmem:[#allocation2 + $0x300] sm:$0xff]
        %v234 = vld [vmem:[#allocation2 + $0x308] sm:$0xff]
        %v235 = vld [vmem:[#allocation2 + $0x318] sm:$0xff]
        %v236 = vld [vmem:[#allocation2 + $0x320] sm:$0xff]
        %v237 = vld [vmem:[#allocation2 + $0x330] sm:$0xff]
        %v238 = vld [vmem:[#allocation2 + $0x338] sm:$0xff]
        %v239 = vld [vmem:[#allocation2 + $0x348] sm:$0xff]
        %v240 = vld [vmem:[#allocation2 + $0x350] sm:$0xff]
        %v241 = vld [vmem:[#allocation2 + $0x360] sm:$0xff]
        %v242 = vld [vmem:[#allocation2 + $0x368] sm:$0xff]
        %v243 = vld [vmem:[#allocation2 + $0x378] sm:$0xff]
        %v244 = vld [vmem:[#allocation2 + $0x380] sm:$0xff]
        %v245 = vld [vmem:[#allocation2 + $0x390] sm:$0xff]
        %v246 = vld [vmem:[#allocation2 + $0x398] sm:$0xff]
        %v247 = vld [vmem:[#allocation2 + $0x3a8] sm:$0xff]
        %v248 = vld [vmem:[#allocation2 + $0x3b0] sm:$0xff]
        %v249 = vld [vmem:[#allocation2 + $0x3c0] sm:$0xff]
        %v250 = vld [vmem:[#allocation2 + $0x3c8] sm:$0xff]
        %v251 = vld [vmem:[#allocation2 + $0x3d8] sm:$0xff]
        %v252 = vld [vmem:[#allocation2 + $0x3e0] sm:$0xff]
        %v253 = vld [vmem:[#allocation2 + $0x3f0] sm:$0xff]
        %v254 = vld [vmem:[#allocation2 + $0x3f8] sm:$0xff]
        %v255 = vld [vmem:[#allocation2 + $0x408] sm:$0xff]
        %v256 = vld [vmem:[#allocation2 + $0x410] sm:$0xff]
        %v257 = vld [vmem:[#allocation2 + $0x420] sm:$0xff]
        %v258 = vld [vmem:[#allocation2 + $0x428] sm:$0xff]
        %v259 = vld [vmem:[#allocation2 + $0x438] sm:$0xff]
        %v260 = vld [vmem:[#allocation2 + $0x440] sm:$0xff]
        %v261 = vld [vmem:[#allocation2 + $0x448] sm:$0xff]
        %v262 = vld [vmem:[#allocation2 + $0x450] sm:$0xff]
        %v263 = vld [vmem:[#allocation2 + $0x468] sm:$0xff]
        %v264 = vld [vmem:[#allocation2 + $0x480] sm:$0xff]
        %v265 = vld [vmem:[#allocation2 + $0x498] sm:$0xff]
        %v266 = vld [vmem:[#allocation2 + $0x4b0] sm:$0xff]
        %v267 = vld [vmem:[#allocation2 + $0x4c8] sm:$0xff]
        %v268 = vld [vmem:[#allocation2 + $0x4e0] sm:$0xff]
        %v269 = vld [vmem:[#allocation2 + $0x4f8] sm:$0xff]
        %v270 = vld [vmem:[#allocation2 + $0x510] sm:$0xff]
        %v271 = vld [vmem:[#allocation2 + $0x528] sm:$0xff]
        %v272 = vld [vmem:[#allocation2 + $0x540] sm:$0xff]
        %v273 = vld [vmem:[#allocation2 + $0x558] sm:$0xff]
        %v274 = vld [vmem:[#allocation2 + $0x570] sm:$0xff]
        %v275 = vld [vmem:[#allocation2 + $0x588] sm:$0xff]
        %v276 = vld [vmem:[#allocation2 + $0x5a0] sm:$0xff]
        %v277 = vld [vmem:[#allocation2 + $0x5b8] sm:$0xff]
        %v278 = vld [vmem:[#allocation2 + $0x5d0] sm:$0xff]
        %v279 = vld [vmem:[#allocation2 + $0x5e8] sm:$0xff]
        %v280 = vld [vmem:[#allocation2 + $0x600] sm:$0xff]
        %v281 = vld [vmem:[#allocation2 + $0x618] sm:$0xff]
        %v282 = vld [vmem:[#allocation2 + $0x630] sm:$0xff]
        %v283 = vld [vmem:[#allocation2 + $0x648] sm:$0xff]
        %v284 = vld [vmem:[#allocation2 + $0x660] sm:$0xff]
        %v285 = vld [vmem:[#allocation2 + $0x678] sm:$0xff]
        %v286 = vld [vmem:[#allocation2 + $0x690] sm:$0xff]
        %v287 = vld [vmem:[#allocation2 + $0x6a8] sm:$0xff]
        %v288 = vld [vmem:[#allocation2 + $0x6c0] sm:$0xff]
        %v289 = vld [vmem:[#allocation2 + $0x6d8] sm:$0xff]
        %v290 = vld [vmem:[#allocation2 + $0x6f0] sm:$0xff]
        %v291 = vld [vmem:[#allocation2 + $0x708] sm:$0xff]
        %v292 = vld [vmem:[#allocation2 + $0x720] sm:$0xff]
        %v293 = vld [vmem:[#allocation2 + $0x738] sm:$0xff]
        %v294 = vld [vmem:[#allocation2 + $0x750] ss:$0 sm:$0xff]
        %v295 = vld [vmem:[#allocation2 + $0x758] ss:$0 sm:$0xff]
        %vm296 = vcmask 326656
        %v298 = vsel %vm296, %v160, 0
        %v301 = vsel %vm296, %v161, 0
        %v304 = vsel %vm296, %v162, 0
        %v307 = vsel %vm296, %v163, 0
        %309 = vmatprep.subr.mxu0 0.0
        %310 = vmatpush1.msra.mxu0 0.0
        %311 = vmatprep.subr.mxu0 0.0
        %312 = vmatpush1.msra.mxu0 0.0
        %313 = vmatprep.subr.mxu0 0.0
        %314 = vmatpush1.msra.mxu0 0.0
        %315 = vmatprep.subr.mxu0 0.0
        %316 = vmatpush1.msra.mxu0 0.0
        %317 = vmatprep.subr.mxu0 0.0
        %318 = vmatpush1.msra.mxu0 0.0
        %319 = vmatprep.subr.mxu0 0.0
        %320 = vmatpush1.msra.mxu0 0.0
        %321 = vmatprep.subr.mxu0 0.0
        %322 = vmatpush1.msra.mxu0 0.0
        %323 = vmatprep.subr.mxu0 0.0
        %324 = vmatpush1.msra.mxu0 0.0
        %325 = vmatprep.subr.mxu0 0.0
        %326 = vmatpush1.msra.mxu0 0.0
        %327 = vmatprep.subr.mxu0 0.0
        %328 = vmatpush1.msra.mxu0 0.0
        %329 = vmatprep.subr.mxu0 0.0
        %330 = vmatpush1.msra.mxu0 0.0
        %331 = vmatprep.subr.mxu0 %v177
        %332 = vmatpush1.msra.mxu0 %v176
        %333 = vmatprep.subr.mxu0 %v174
        %334 = vmatpush1.msra.mxu0 %v173
        %335 = vmatprep.subr.mxu0 %v171
        %336 = vmatpush1.msra.mxu0 %v170
        %337 = vmatprep.subr.mxu0 %v168
        %338 = vmatpush1.msra.mxu0 %v167
        %339 = vmatprep.subr.mxu0 %v165
        %340 = vmatpush1.msra.mxu0 %v164
        %341 = vmatprep.subr.mxu0 0.0
        %342 = vmatpush2.msra.mxu0 0.0
        %343 = vmatprep.subr.mxu0 0.0
        %344 = vmatpush2.msra.mxu0 0.0
        %345 = vmatprep.subr.mxu0 0.0
        %346 = vmatpush2.msra.mxu0 0.0
        %347 = vmatprep.subr.mxu0 0.0
        %348 = vmatpush2.msra.mxu0 0.0
        %349 = vmatprep.subr.mxu0 0.0
        %350 = vmatpush2.msra.mxu0 0.0
        %351 = vmatprep.subr.mxu0 0.0
        %352 = vmatpush2.msra.mxu0 0.0
        %353 = vmatprep.subr.mxu0 0.0
        %354 = vmatpush2.msra.mxu0 0.0
        %355 = vmatprep.subr.mxu0 0.0
        %356 = vmatpush2.msra.mxu0 0.0
        %357 = vmatprep.subr.mxu0 0.0
        %358 = vmatpush2.msra.mxu0 0.0
        %359 = vmatprep.subr.mxu0 0.0
        %360 = vmatpush2.msra.mxu0 0.0
        %361 = vmatprep.subr.mxu0 0.0
        %362 = vmatpush2.msra.mxu0 0.0
        %363 = vmatprep.subr.mxu0 0.0
        %364 = vmatpush2.msra.mxu0 0.0
        %365 = vmatprep.subr.mxu0 0.0
        %366 = vmatpush2.msra.mxu0 0.0
        %367 = vmatprep.subr.mxu0 0.0
        %368 = vmatpush2.msra.mxu0 0.0
        %369 = vmatprep.subr.mxu0 0.0
        %370 = vmatpush2.msra.mxu0 0.0
        %371 = vmatprep.subr.mxu0 0.0
        %372 = vmatpush2.msra.mxu0 0.0
        %373 = vmatprep.mubr.f32.mxu0 0.0
        %374 = vmatmul.mubr.f32.gmra.mxu0 %v298
        %v375 = vpop.f32.mrf.mxu0
        %v376 = vadd.f32 0.0, %v375
        %v377 = vpop.f32.mrf.mxu0
        %v378 = vadd.f32 0.0, %v377
        %379 = vmatprep.mubr.f32.mxu0 0.0
        %380 = vmatmul.mubr.f32.gmra.mxu0 %v301
        %v381 = vpop.f32.mrf.mxu0
        %v382 = vadd.f32 0.0, %v381
        %v383 = vpop.f32.mrf.mxu0
        %v384 = vadd.f32 0.0, %v383
        %385 = vmatprep.mubr.f32.mxu0 0.0
        %386 = vmatmul.mubr.f32.gmra.mxu0 %v304
        %v387 = vpop.f32.mrf.mxu0
        %v388 = vadd.f32 0.0, %v387
        %v389 = vpop.f32.mrf.mxu0
        %v390 = vadd.f32 0.0, %v389
        %391 = vmatprep.mubr.f32.mxu0 0.0
        %392 = vmatmul.mubr.f32.gmra.mxu0 %v307
        %v393 = vpop.f32.mrf.mxu0
        %v394 = vadd.f32 0.0, %v393
        %v395 = vpop.f32.mrf.mxu0
        %v396 = vadd.f32 0.0, %v395
        %397 = vdwg.mxu0
        %398 = vmatprep.subr.mxu0 0.0
        %399 = vmatpush1.msra.mxu0 0.0
        %400 = vmatprep.subr.mxu0 0.0
        %401 = vmatpush1.msra.mxu0 0.0
        %402 = vmatprep.subr.mxu0 0.0
        %403 = vmatpush1.msra.mxu0 0.0
        %404 = vmatprep.subr.mxu0 0.0
        %405 = vmatpush1.msra.mxu0 0.0
        %406 = vmatprep.subr.mxu0 0.0
        %407 = vmatpush1.msra.mxu0 0.0
        %408 = vmatprep.subr.mxu0 0.0
        %409 = vmatpush1.msra.mxu0 0.0
        %410 = vmatprep.subr.mxu0 0.0
        %411 = vmatpush1.msra.mxu0 0.0
        %412 = vmatprep.subr.mxu0 0.0
        %413 = vmatpush1.msra.mxu0 0.0
        %414 = vmatprep.subr.mxu0 0.0
        %415 = vmatpush1.msra.mxu0 0.0
        %416 = vmatprep.subr.mxu0 0.0
        %417 = vmatpush1.msra.mxu0 0.0
        %418 = vmatprep.subr.mxu0 0.0
        %419 = vmatpush1.msra.mxu0 0.0
        %420 = vmatprep.subr.mxu0 0.0
        %421 = vmatpush1.msra.mxu0 %v178
        %422 = vmatprep.subr.mxu0 0.0
        %423 = vmatpush1.msra.mxu0 %v175
        %424 = vmatprep.subr.mxu0 0.0
        %425 = vmatpush1.msra.mxu0 %v172
        %426 = vmatprep.subr.mxu0 0.0
        %427 = vmatpush1.msra.mxu0 %v169
        %428 = vmatprep.subr.mxu0 0.0
        %429 = vmatpush1.msra.mxu0 %v166
        %430 = vmatprep.subr.mxu0 0.0
        %431 = vmatpush2.msra.mxu0 0.0
        %432 = vmatprep.subr.mxu0 0.0
        %433 = vmatpush2.msra.mxu0 0.0
        %434 = vmatprep.subr.mxu0 0.0
        %435 = vmatpush2.msra.mxu0 0.0
        %436 = vmatprep.subr.mxu0 0.0
        %437 = vmatpush2.msra.mxu0 0.0
        %438 = vmatprep.subr.mxu0 0.0
        %439 = vmatpush2.msra.mxu0 0.0
        %440 = vmatprep.subr.mxu0 0.0
        %441 = vmatpush2.msra.mxu0 0.0
        %442 = vmatprep.subr.mxu0 0.0
        %443 = vmatpush2.msra.mxu0 0.0
        %444 = vmatprep.subr.mxu0 0.0
        %445 = vmatpush2.msra.mxu0 0.0
        %446 = vmatprep.subr.mxu0 0.0
        %447 = vmatpush2.msra.mxu0 0.0
        %448 = vmatprep.subr.mxu0 0.0
        %449 = vmatpush2.msra.mxu0 0.0
        %450 = vmatprep.subr.mxu0 0.0
        %451 = vmatpush2.msra.mxu0 0.0
        %452 = vmatprep.subr.mxu0 0.0
        %453 = vmatpush2.msra.mxu0 0.0
        %454 = vmatprep.subr.mxu0 0.0
        %455 = vmatpush2.msra.mxu0 0.0
        %456 = vmatprep.subr.mxu0 0.0
        %457 = vmatpush2.msra.mxu0 0.0
        %458 = vmatprep.subr.mxu0 0.0
        %459 = vmatpush2.msra.mxu0 0.0
        %460 = vmatprep.subr.mxu0 0.0
        %461 = vmatpush2.msra.mxu0 0.0
        %462 = vmatprep.mubr.f32.mxu0 0.0
        %463 = vmatmul.mubr.f32.gmra.mxu0 %v298
        %v464 = vpop.f32.mrf.mxu0
        %v465 = vadd.f32 0.0, %v464
        %v466 = vpop.f32.mrf.mxu0
        %467 = vmatprep.mubr.f32.mxu0 0.0
        %468 = vmatmul.mubr.f32.gmra.mxu0 %v301
        %v469 = vpop.f32.mrf.mxu0
        %v470 = vadd.f32 0.0, %v469
        %v471 = vpop.f32.mrf.mxu0
        %472 = vmatprep.mubr.f32.mxu0 0.0
        %473 = vmatmul.mubr.f32.gmra.mxu0 %v304
        %v474 = vpop.f32.mrf.mxu0
        %v475 = vadd.f32 0.0, %v474
        %v476 = vpop.f32.mrf.mxu0
        %477 = vmatprep.mubr.f32.mxu0 0.0
        %478 = vmatmul.mubr.f32.gmra.mxu0 %v307
        %v479 = vpop.f32.mrf.mxu0
        %v480 = vadd.f32 0.0, %v479
        %v481 = vpop.f32.mrf.mxu0
        %482 = vdwg.mxu0
        %v483 = vmax.f32 %v376, 0.0
        %v484 = vmax.f32 %v378, 0.0
        %v485 = vmax.f32 %v465, 0.0
        %v486 = vmax.f32 %v382, 0.0
        %v487 = vmax.f32 %v384, 0.0
        %v488 = vmax.f32 %v470, 0.0
        %v489 = vmax.f32 %v388, 0.0
        %v490 = vmax.f32 %v390, 0.0
        %v491 = vmax.f32 %v475, 0.0
        %v492 = vmax.f32 %v394, 0.0
        %v493 = vmax.f32 %v396, 0.0
        %v494 = vmax.f32 %v480, 0.0
        %vm495 = vcmask 523264
        %v497 = vsel %vm495, %v485, 0
        %v500 = vsel %vm495, %v488, 0
        %v503 = vsel %vm495, %v491, 0
        %v506 = vsel %vm495, %v494, 0
        %508 = vmatprep.subr.mxu0 %v210
        %509 = vmatpush1.msra.mxu0 %v209
        %510 = vmatprep.subr.mxu0 %v208
        %511 = vmatpush1.msra.mxu0 %v207
        %512 = vmatprep.subr.mxu0 %v206
        %513 = vmatpush1.msra.mxu0 %v205
        %514 = vmatprep.subr.mxu0 %v204
        %515 = vmatpush1.msra.mxu0 %v203
        %516 = vmatprep.subr.mxu0 %v202
        %517 = vmatpush1.msra.mxu0 %v201
        %518 = vmatprep.subr.mxu0 %v200
        %519 = vmatpush1.msra.mxu0 %v199
        %520 = vmatprep.subr.mxu0 %v198
        %521 = vmatpush1.msra.mxu0 %v197
        %522 = vmatprep.subr.mxu0 %v196
        %523 = vmatpush1.msra.mxu0 %v195
        %524 = vmatprep.subr.mxu0 %v194
        %525 = vmatpush1.msra.mxu0 %v193
        %526 = vmatprep.subr.mxu0 %v192
        %527 = vmatpush1.msra.mxu0 %v191
        %528 = vmatprep.subr.mxu0 %v190
        %529 = vmatpush1.msra.mxu0 %v189
        %530 = vmatprep.subr.mxu0 %v188
        %531 = vmatpush1.msra.mxu0 %v187
        %532 = vmatprep.subr.mxu0 %v186
        %533 = vmatpush1.msra.mxu0 %v185
        %534 = vmatprep.subr.mxu0 %v184
        %535 = vmatpush1.msra.mxu0 %v183
        %536 = vmatprep.subr.mxu0 %v182
        %537 = vmatpush1.msra.mxu0 %v181
        %538 = vmatprep.subr.mxu0 %v180
        %539 = vmatpush1.msra.mxu0 %v179
        %540 = vmatprep.subr.mxu0 %v242
        %541 = vmatpush2.msra.mxu0 %v241
        %542 = vmatprep.subr.mxu0 %v240
        %543 = vmatpush2.msra.mxu0 %v239
        %544 = vmatprep.subr.mxu0 %v238
        %545 = vmatpush2.msra.mxu0 %v237
        %546 = vmatprep.subr.mxu0 %v236
        %547 = vmatpush2.msra.mxu0 %v235
        %548 = vmatprep.subr.mxu0 %v234
        %549 = vmatpush2.msra.mxu0 %v233
        %550 = vmatprep.subr.mxu0 %v232
        %551 = vmatpush2.msra.mxu0 %v231
        %552 = vmatprep.subr.mxu0 %v230
        %553 = vmatpush2.msra.mxu0 %v229
        %554 = vmatprep.subr.mxu0 %v228
        %555 = vmatpush2.msra.mxu0 %v227
        %556 = vmatprep.subr.mxu0 %v226
        %557 = vmatpush2.msra.mxu0 %v225
        %558 = vmatprep.subr.mxu0 %v224
        %559 = vmatpush2.msra.mxu0 %v223
        %560 = vmatprep.subr.mxu0 %v222
        %561 = vmatpush2.msra.mxu0 %v221
        %562 = vmatprep.subr.mxu0 %v220
        %563 = vmatpush2.msra.mxu0 %v219
        %564 = vmatprep.subr.mxu0 %v218
        %565 = vmatpush2.msra.mxu0 %v217
        %566 = vmatprep.subr.mxu0 %v216
        %567 = vmatpush2.msra.mxu0 %v215
        %568 = vmatprep.subr.mxu0 %v214
        %569 = vmatpush2.msra.mxu0 %v213
        %570 = vmatprep.subr.mxu0 %v212
        %571 = vmatpush2.msra.mxu0 %v211
        %572 = vmatprep.mubr.f32.mxu0 %v484
        %573 = vmatmul.mubr.f32.gmra.mxu0 %v483
        %v574 = vpop.f32.mrf.mxu0
        %v575 = vadd.f32 0.0, %v574
        %v576 = vpop.f32.mrf.mxu0
        %v577 = vadd.f32 0.0, %v576
        %578 = vmatprep.mubr.f32.mxu0 %v487
        %579 = vmatmul.mubr.f32.gmra.mxu0 %v486
        %v580 = vpop.f32.mrf.mxu0
        %v581 = vadd.f32 0.0, %v580
        %v582 = vpop.f32.mrf.mxu0
        %v583 = vadd.f32 0.0, %v582
        %584 = vmatprep.mubr.f32.mxu0 %v490
        %585 = vmatmul.mubr.f32.gmra.mxu0 %v489
        %v586 = vpop.f32.mrf.mxu0
        %v587 = vadd.f32 0.0, %v586
        %v588 = vpop.f32.mrf.mxu0
        %v589 = vadd.f32 0.0, %v588
        %590 = vmatprep.mubr.f32.mxu0 %v493
        %591 = vmatmul.mubr.f32.gmra.mxu0 %v492
        %v592 = vpop.f32.mrf.mxu0
        %v593 = vadd.f32 0.0, %v592
        %v594 = vpop.f32.mrf.mxu0
        %v595 = vadd.f32 0.0, %v594
        %596 = vdwg.mxu0
        %597 = vmatprep.subr.mxu0 0.0
        %598 = vmatpush1.msra.mxu0 0.0
        %599 = vmatprep.subr.mxu0 0.0
        %600 = vmatpush1.msra.mxu0 0.0
        %601 = vmatprep.subr.mxu0 0.0
        %602 = vmatpush1.msra.mxu0 0.0
        %603 = vmatprep.subr.mxu0 0.0
        %604 = vmatpush1.msra.mxu0 0.0
        %605 = vmatprep.subr.mxu0 0.0
        %606 = vmatpush1.msra.mxu0 0.0
        %607 = vmatprep.subr.mxu0 0.0
        %608 = vmatpush1.msra.mxu0 0.0
        %609 = vmatprep.subr.mxu0 0.0
        %610 = vmatpush1.msra.mxu0 0.0
        %611 = vmatprep.subr.mxu0 0.0
        %612 = vmatpush1.msra.mxu0 0.0
        %613 = vmatprep.subr.mxu0 %v258
        %614 = vmatpush1.msra.mxu0 %v257
        %615 = vmatprep.subr.mxu0 %v256
        %616 = vmatpush1.msra.mxu0 %v255
        %617 = vmatprep.subr.mxu0 %v254
        %618 = vmatpush1.msra.mxu0 %v253
        %619 = vmatprep.subr.mxu0 %v252
        %620 = vmatpush1.msra.mxu0 %v251
        %621 = vmatprep.subr.mxu0 %v250
        %622 = vmatpush1.msra.mxu0 %v249
        %623 = vmatprep.subr.mxu0 %v248
        %624 = vmatpush1.msra.mxu0 %v247
        %625 = vmatprep.subr.mxu0 %v246
        %626 = vmatpush1.msra.mxu0 %v245
        %627 = vmatprep.subr.mxu0 %v244
        %628 = vmatpush1.msra.mxu0 %v243
        %629 = vmatprep.subr.mxu0 0.0
        %630 = vmatpush2.msra.mxu0 0.0
        %631 = vmatprep.subr.mxu0 0.0
        %632 = vmatpush2.msra.mxu0 0.0
        %633 = vmatprep.subr.mxu0 0.0
        %634 = vmatpush2.msra.mxu0 0.0
        %635 = vmatprep.subr.mxu0 0.0
        %636 = vmatpush2.msra.mxu0 0.0
        %637 = vmatprep.subr.mxu0 0.0
        %638 = vmatpush2.msra.mxu0 0.0
        %639 = vmatprep.subr.mxu0 0.0
        %640 = vmatpush2.msra.mxu0 0.0
        %641 = vmatprep.subr.mxu0 0.0
        %642 = vmatpush2.msra.mxu0 0.0
        %643 = vmatprep.subr.mxu0 0.0
        %644 = vmatpush2.msra.mxu0 0.0
        %645 = vmatprep.subr.mxu0 0.0
        %646 = vmatpush2.msra.mxu0 0.0
        %647 = vmatprep.subr.mxu0 0.0
        %648 = vmatpush2.msra.mxu0 0.0
        %649 = vmatprep.subr.mxu0 0.0
        %650 = vmatpush2.msra.mxu0 0.0
        %651 = vmatprep.subr.mxu0 0.0
        %652 = vmatpush2.msra.mxu0 0.0
        %653 = vmatprep.subr.mxu0 0.0
        %654 = vmatpush2.msra.mxu0 0.0
        %655 = vmatprep.subr.mxu0 0.0
        %656 = vmatpush2.msra.mxu0 0.0
        %657 = vmatprep.subr.mxu0 0.0
        %658 = vmatpush2.msra.mxu0 0.0
        %659 = vmatprep.subr.mxu0 0.0
        %660 = vmatpush2.msra.mxu0 0.0
        %661 = vmatprep.mubr.f32.mxu0 0.0
        %662 = vmatmul.mubr.f32.gmra.mxu0 %v497
        %v663 = vpop.f32.mrf.mxu0
        %v664 = vadd.f32 %v575, %v663
        %v665 = vpop.f32.mrf.mxu0
        %v666 = vadd.f32 %v577, %v665
        %667 = vmatprep.mubr.f32.mxu0 0.0
        %668 = vmatmul.mubr.f32.gmra.mxu0 %v500
        %v669 = vpop.f32.mrf.mxu0
        %v670 = vadd.f32 %v581, %v669
        %v671 = vpop.f32.mrf.mxu0
        %v672 = vadd.f32 %v583, %v671
        %673 = vmatprep.mubr.f32.mxu0 0.0
        %674 = vmatmul.mubr.f32.gmra.mxu0 %v503
        %v675 = vpop.f32.mrf.mxu0
        %v676 = vadd.f32 %v587, %v675
        %v677 = vpop.f32.mrf.mxu0
        %v678 = vadd.f32 %v589, %v677
        %679 = vmatprep.mubr.f32.mxu0 0.0
        %680 = vmatmul.mubr.f32.gmra.mxu0 %v506
        %v681 = vpop.f32.mrf.mxu0
        %v682 = vadd.f32 %v593, %v681
        %v683 = vpop.f32.mrf.mxu0
        %v684 = vadd.f32 %v595, %v683
        %685 = vdwg.mxu0
        %v686 = vadd.f32 %v664, %v294
        %v687 = vadd.f32 %v670, %v294
        %v688 = vadd.f32 %v676, %v294
        %v689 = vadd.f32 %v682, %v294
        %v690 = vmax.f32 %v686, 0.0
        %v691 = vmax.f32 %v687, 0.0
        %v692 = vmax.f32 %v688, 0.0
        %v693 = vmax.f32 %v689, 0.0
        %v694 = vadd.f32 %v666, %v295
        %v695 = vadd.f32 %v672, %v295
        %v696 = vadd.f32 %v678, %v295
        %v697 = vadd.f32 %v684, %v295
        %vm698 = vcmask 64512
        %v699 = vsel %vm698, %v694, -inf
        %700 = vmax.xlane.f32.xlu0 %v699
        %v701 = vpop.xlane.xlu0 %700
        %v702 = vsel %vm698, %v695, -inf
        %703 = vmax.xlane.f32.xlu0 %v702
        %v704 = vpop.xlane.xlu0 %703
        %v705 = vsel %vm698, %v696, -inf
        %706 = vmax.xlane.f32.xlu0 %v705
        %v707 = vpop.xlane.xlu0 %706
        %v708 = vsel %vm698, %v697, -inf
        %709 = vmax.xlane.f32.xlu0 %v708
        %v710 = vpop.xlane.xlu0 %709
        %v711 = vsub.f32 %v694, %v701
        %v712 = vsub.f32 %v695, %v704
        %v713 = vsub.f32 %v696, %v707
        %v714 = vsub.f32 %v697, %v710
        %v715 = vmul.f32 %v711, 1.442695
        %v716 = vpow.pop %v715
        %v717 = vmul.f32 %v712, 1.442695
        %v718 = vpow.pop %v717
        %v719 = vmul.f32 %v713, 1.442695
        %v720 = vpow.pop %v719
        %v721 = vmul.f32 %v714, 1.442695
        %v722 = vpow.pop %v721
        %v724 = vsel %vm698, %v716, 0
        %v727 = vsel %vm698, %v718, 0
        %v730 = vsel %vm698, %v720, 0
        %v733 = vsel %vm698, %v722, 0
        %735 = vmatprep.subr.mxu0 0.0
        %736 = vmatpush1.msra.mxu0 0.0
        %737 = vmatprep.subr.mxu0 0.0
        %738 = vmatpush1.msra.mxu0 0.0
        %739 = vmatprep.subr.mxu0 0.0
        %740 = vmatpush1.msra.mxu0 0.0
        %741 = vmatprep.subr.mxu0 0.0
        %742 = vmatpush1.msra.mxu0 0.0
        %743 = vmatprep.subr.mxu0 0.0
        %744 = vmatpush1.msra.mxu0 0.0
        %745 = vmatprep.subr.mxu0 0.0
        %746 = vmatpush1.msra.mxu0 0.0
        %747 = vmatprep.subr.mxu0 0.0
        %748 = vmatpush1.msra.mxu0 0.0
        %749 = vmatprep.subr.mxu0 0.0
        %750 = vmatpush1.msra.mxu0 0.0
        %751 = vmatprep.subr.mxu0 0.0
        %752 = vmatpush1.msra.mxu0 0.0
        %753 = vmatprep.subr.mxu0 0.0
        %754 = vmatpush1.msra.mxu0 0.0
        %755 = vmatprep.subr.mxu0 0.0
        %756 = vmatpush1.msra.mxu0 0.0
        %757 = vmatprep.subr.mxu0 0.0
        %758 = vmatpush1.msra.mxu0 0.0
        %759 = vmatprep.subr.mxu0 0.0
        %760 = vmatpush1.msra.mxu0 0.0
        %761 = vmatprep.subr.mxu0 0.0
        %762 = vmatpush1.msra.mxu0 0.0
        %763 = vmatprep.subr.mxu0 0.0
        %764 = vmatpush1.msra.mxu0 0.0
        %765 = vmatprep.subr.mxu0 %v260
        %766 = vmatpush1.msra.mxu0 %v259
        %767 = vmatprep.subr.mxu0 0.0
        %768 = vmatpush2.msra.mxu0 0.0
        %769 = vmatprep.subr.mxu0 0.0
        %770 = vmatpush2.msra.mxu0 0.0
        %771 = vmatprep.subr.mxu0 0.0
        %772 = vmatpush2.msra.mxu0 0.0
        %773 = vmatprep.subr.mxu0 0.0
        %774 = vmatpush2.msra.mxu0 0.0
        %775 = vmatprep.subr.mxu0 0.0
        %776 = vmatpush2.msra.mxu0 0.0
        %777 = vmatprep.subr.mxu0 0.0
        %778 = vmatpush2.msra.mxu0 0.0
        %779 = vmatprep.subr.mxu0 0.0
        %780 = vmatpush2.msra.mxu0 0.0
        %781 = vmatprep.subr.mxu0 0.0
        %782 = vmatpush2.msra.mxu0 0.0
        %783 = vmatprep.subr.mxu0 0.0
        %784 = vmatpush2.msra.mxu0 0.0
        %785 = vmatprep.subr.mxu0 0.0
        %786 = vmatpush2.msra.mxu0 0.0
        %787 = vmatprep.subr.mxu0 0.0
        %788 = vmatpush2.msra.mxu0 0.0
        %789 = vmatprep.subr.mxu0 0.0
        %790 = vmatpush2.msra.mxu0 0.0
        %791 = vmatprep.subr.mxu0 0.0
        %792 = vmatpush2.msra.mxu0 0.0
        %793 = vmatprep.subr.mxu0 0.0
        %794 = vmatpush2.msra.mxu0 0.0
        %795 = vmatprep.subr.mxu0 0.0
        %796 = vmatpush2.msra.mxu0 0.0
        %797 = vmatprep.subr.mxu0 0.0
        %798 = vmatpush2.msra.mxu0 0.0
        %799 = vmatprep.mubr.f32.mxu0 0.0
        %800 = vmatmul.mubr.f32.gmra.mxu0 %v724
        %v801 = vpop.f32.mrf.mxu0
        %v802 = vadd.f32 0.0, %v801
        %v803 = vpop.f32.mrf.mxu0
        %v804 = vadd.f32 0.0, %v803
        %805 = vmatprep.mubr.f32.mxu0 0.0
        %806 = vmatmul.mubr.f32.gmra.mxu0 %v727
        %v807 = vpop.f32.mrf.mxu0
        %v808 = vadd.f32 0.0, %v807
        %v809 = vpop.f32.mrf.mxu0
        %v810 = vadd.f32 0.0, %v809
        %811 = vmatprep.mubr.f32.mxu0 0.0
        %812 = vmatmul.mubr.f32.gmra.mxu0 %v730
        %v813 = vpop.f32.mrf.mxu0
        %v814 = vadd.f32 0.0, %v813
        %v815 = vpop.f32.mrf.mxu0
        %v816 = vadd.f32 0.0, %v815
        %817 = vmatprep.mubr.f32.mxu0 0.0
        %818 = vmatmul.mubr.f32.gmra.mxu0 %v733
        %v819 = vpop.f32.mrf.mxu0
        %v820 = vadd.f32 0.0, %v819
        %v821 = vpop.f32.mrf.mxu0
        %v822 = vadd.f32 0.0, %v821
        %823 = vdwg.mxu0
        %824 = vmatprep.subr.mxu0 0.0
        %825 = vmatpush1.msra.mxu0 0.0
        %826 = vmatprep.subr.mxu0 0.0
        %827 = vmatpush1.msra.mxu0 0.0
        %828 = vmatprep.subr.mxu0 0.0
        %829 = vmatpush1.msra.mxu0 0.0
        %830 = vmatprep.subr.mxu0 0.0
        %831 = vmatpush1.msra.mxu0 0.0
        %832 = vmatprep.subr.mxu0 0.0
        %833 = vmatpush1.msra.mxu0 0.0
        %834 = vmatprep.subr.mxu0 0.0
        %835 = vmatpush1.msra.mxu0 0.0
        %836 = vmatprep.subr.mxu0 0.0
        %837 = vmatpush1.msra.mxu0 0.0
        %838 = vmatprep.subr.mxu0 0.0
        %839 = vmatpush1.msra.mxu0 0.0
        %840 = vmatprep.subr.mxu0 0.0
        %841 = vmatpush1.msra.mxu0 0.0
        %842 = vmatprep.subr.mxu0 0.0
        %843 = vmatpush1.msra.mxu0 0.0
        %844 = vmatprep.subr.mxu0 0.0
        %845 = vmatpush1.msra.mxu0 0.0
        %846 = vmatprep.subr.mxu0 0.0
        %847 = vmatpush1.msra.mxu0 0.0
        %848 = vmatprep.subr.mxu0 0.0
        %849 = vmatpush1.msra.mxu0 0.0
        %850 = vmatprep.subr.mxu0 0.0
        %851 = vmatpush1.msra.mxu0 0.0
        %852 = vmatprep.subr.mxu0 0.0
        %853 = vmatpush1.msra.mxu0 0.0
        %854 = vmatprep.subr.mxu0 0.0
        %855 = vmatpush1.msra.mxu0 %v261
        %856 = vmatprep.subr.mxu0 0.0
        %857 = vmatpush2.msra.mxu0 0.0
        %858 = vmatprep.subr.mxu0 0.0
        %859 = vmatpush2.msra.mxu0 0.0
        %860 = vmatprep.subr.mxu0 0.0
        %861 = vmatpush2.msra.mxu0 0.0
        %862 = vmatprep.subr.mxu0 0.0
        %863 = vmatpush2.msra.mxu0 0.0
        %864 = vmatprep.subr.mxu0 0.0
        %865 = vmatpush2.msra.mxu0 0.0
        %866 = vmatprep.subr.mxu0 0.0
        %867 = vmatpush2.msra.mxu0 0.0
        %868 = vmatprep.subr.mxu0 0.0
        %869 = vmatpush2.msra.mxu0 0.0
        %870 = vmatprep.subr.mxu0 0.0
        %871 = vmatpush2.msra.mxu0 0.0
        %872 = vmatprep.subr.mxu0 0.0
        %873 = vmatpush2.msra.mxu0 0.0
        %874 = vmatprep.subr.mxu0 0.0
        %875 = vmatpush2.msra.mxu0 0.0
        %876 = vmatprep.subr.mxu0 0.0
        %877 = vmatpush2.msra.mxu0 0.0
        %878 = vmatprep.subr.mxu0 0.0
        %879 = vmatpush2.msra.mxu0 0.0
        %880 = vmatprep.subr.mxu0 0.0
        %881 = vmatpush2.msra.mxu0 0.0
        %882 = vmatprep.subr.mxu0 0.0
        %883 = vmatpush2.msra.mxu0 0.0
        %884 = vmatprep.subr.mxu0 0.0
        %885 = vmatpush2.msra.mxu0 0.0
        %886 = vmatprep.subr.mxu0 0.0
        %887 = vmatpush2.msra.mxu0 0.0
        %888 = vmatprep.mubr.f32.mxu0 0.0
        %889 = vmatmul.mubr.f32.gmra.mxu0 %v724
        %v890 = vpop.f32.mrf.mxu0
        %v891 = vadd.f32 0.0, %v890
        %v892 = vpop.f32.mrf.mxu0
        %893 = vmatprep.mubr.f32.mxu0 0.0
        %894 = vmatmul.mubr.f32.gmra.mxu0 %v727
        %v895 = vpop.f32.mrf.mxu0
        %v896 = vadd.f32 0.0, %v895
        %v897 = vpop.f32.mrf.mxu0
        %898 = vmatprep.mubr.f32.mxu0 0.0
        %899 = vmatmul.mubr.f32.gmra.mxu0 %v730
        %v900 = vpop.f32.mrf.mxu0
        %v901 = vadd.f32 0.0, %v900
        %v902 = vpop.f32.mrf.mxu0
        %903 = vmatprep.mubr.f32.mxu0 0.0
        %904 = vmatmul.mubr.f32.gmra.mxu0 %v733
        %v905 = vpop.f32.mrf.mxu0
        %v906 = vadd.f32 0.0, %v905
        %v907 = vpop.f32.mrf.mxu0
        %908 = vdwg.mxu0
        %v909 = vmul.f32 %v802, %v690
        %v910 = vmul.f32 %v804, %v690
        %v911 = vmul.f32 %v808, %v691
        %v912 = vmul.f32 %v810, %v691
        %v913 = vmul.f32 %v814, %v692
        %v914 = vmul.f32 %v816, %v692
        %v915 = vmul.f32 %v820, %v693
        %v916 = vmul.f32 %v822, %v693
        %917 = vmatprep.subr.mxu0 0.0
        %918 = vmatpush1.msra.mxu0 %v277
        %919 = vmatprep.subr.mxu0 0.0
        %920 = vmatpush1.msra.mxu0 %v276
        %921 = vmatprep.subr.mxu0 0.0
        %922 = vmatpush1.msra.mxu0 %v275
        %923 = vmatprep.subr.mxu0 0.0
        %924 = vmatpush1.msra.mxu0 %v274
        %925 = vmatprep.subr.mxu0 0.0
        %926 = vmatpush1.msra.mxu0 %v273
        %927 = vmatprep.subr.mxu0 0.0
        %928 = vmatpush1.msra.mxu0 %v272
        %929 = vmatprep.subr.mxu0 0.0
        %930 = vmatpush1.msra.mxu0 %v271
        %931 = vmatprep.subr.mxu0 0.0
        %932 = vmatpush1.msra.mxu0 %v270
        %933 = vmatprep.subr.mxu0 0.0
        %934 = vmatpush1.msra.mxu0 %v269
        %935 = vmatprep.subr.mxu0 0.0
        %936 = vmatpush1.msra.mxu0 %v268
        %937 = vmatprep.subr.mxu0 0.0
        %938 = vmatpush1.msra.mxu0 %v267
        %939 = vmatprep.subr.mxu0 0.0
        %940 = vmatpush1.msra.mxu0 %v266
        %941 = vmatprep.subr.mxu0 0.0
        %942 = vmatpush1.msra.mxu0 %v265
        %943 = vmatprep.subr.mxu0 0.0
        %944 = vmatpush1.msra.mxu0 %v264
        %945 = vmatprep.subr.mxu0 0.0
        %946 = vmatpush1.msra.mxu0 %v263
        %947 = vmatprep.subr.mxu0 0.0
        %948 = vmatpush1.msra.mxu0 %v262
        %949 = vmatprep.subr.mxu0 0.0
        %950 = vmatpush2.msra.mxu0 %v293
        %951 = vmatprep.subr.mxu0 0.0
        %952 = vmatpush2.msra.mxu0 %v292
        %953 = vmatprep.subr.mxu0 0.0
        %954 = vmatpush2.msra.mxu0 %v291
        %955 = vmatprep.subr.mxu0 0.0
        %956 = vmatpush2.msra.mxu0 %v290
        %957 = vmatprep.subr.mxu0 0.0
        %958 = vmatpush2.msra.mxu0 %v289
        %959 = vmatprep.subr.mxu0 0.0
        %960 = vmatpush2.msra.mxu0 %v288
        %961 = vmatprep.subr.mxu0 0.0
        %962 = vmatpush2.msra.mxu0 %v287
        %963 = vmatprep.subr.mxu0 0.0
        %964 = vmatpush2.msra.mxu0 %v286
        %965 = vmatprep.subr.mxu0 0.0
        %966 = vmatpush2.msra.mxu0 %v285
        %967 = vmatprep.subr.mxu0 0.0
        %968 = vmatpush2.msra.mxu0 %v284
        %969 = vmatprep.subr.mxu0 0.0
        %970 = vmatpush2.msra.mxu0 %v283
        %971 = vmatprep.subr.mxu0 0.0
        %972 = vmatpush2.msra.mxu0 %v282
        %973 = vmatprep.subr.mxu0 0.0
        %974 = vmatpush2.msra.mxu0 %v281
        %975 = vmatprep.subr.mxu0 0.0
        %976 = vmatpush2.msra.mxu0 %v280
        %977 = vmatprep.subr.mxu0 0.0
        %978 = vmatpush2.msra.mxu0 %v279
        %979 = vmatprep.subr.mxu0 0.0
        %980 = vmatpush2.msra.mxu0 %v278
        %981 = vmatprep.mubr.f32.mxu0 %v910
        %982 = vmatmul.mubr.f32.gmra.mxu0 %v909
        %v983 = vpop.f32.mrf.mxu0
        %v984 = vadd.f32 0.0, %v983
        %v985 = vpop.f32.mrf.mxu0
        %986 = vmatprep.mubr.f32.mxu0 %v912
        %987 = vmatmul.mubr.f32.gmra.mxu0 %v911
        %v988 = vpop.f32.mrf.mxu0
        %v989 = vadd.f32 0.0, %v988
        %v990 = vpop.f32.mrf.mxu0
        %991 = vmatprep.mubr.f32.mxu0 %v914
        %992 = vmatmul.mubr.f32.gmra.mxu0 %v913
        %v993 = vpop.f32.mrf.mxu0
        %v994 = vadd.f32 0.0, %v993
        %v995 = vpop.f32.mrf.mxu0
        %996 = vmatprep.mubr.f32.mxu0 %v916
        %997 = vmatmul.mubr.f32.gmra.mxu0 %v915
        %v998 = vpop.f32.mrf.mxu0
        %v999 = vadd.f32 0.0, %v998
        %v1000 = vpop.f32.mrf.mxu0
        %1001 = vdwg.mxu0
        %v1002 = vrcp.pop %v891
        %v1003 = vmul.f32 %v984, %v1002
        %v1004 = vrcp.pop %v896
        %v1005 = vmul.f32 %v989, %v1004
        %v1006 = vrcp.pop %v901
        %v1007 = vmul.f32 %v994, %v1006
        %v1008 = vrcp.pop %v906
        %v1009 = vmul.f32 %v999, %v1008
        %1010 = vst [vmem:[%s152] sm:$0xff] %v1003
        %1011 = vst [vmem:[%s152 + $0x8] sm:$0xff] %v1005
        %1012 = vst [vmem:[%s152 + $0x10] sm:$0xff] %v1007
        %1013 = vst [vmem:[%s152 + $0x18] sm:$0xff] %v1009
        %s1014 = sand.u32 %s72, 1
        %s1015 = scalar_lea.sflag [#allocation4], %s1014
        %s1016 = sand.u32 %s72, 1
        %s1017 = smul.addr %s1016, 32
        %s1018 = scalar_lea.vmem [#allocation5], %s1017
        // Predicated region
        $region33: #{tpu_custom_call.1} parent=27 // pred_check
          %p1019 = pneg %p82
        $region34: #{tpu_custom_call.1} parent=27 // pred_check_branch
          %1021 = sbr.rel (%p1019) target = $region36
        $region35: #{tpu_custom_call.1} parent=27 // pred_region
          %s1022 = smul.u32 4, %s17
          %s1024 = ssub.s32 512, 512
          %1025 = vsyncadd %s1015, %s1024
          %s1026 = smul.addr %s1022, 128
          %s1027 = scalar_lea.hbm %s2, %s1026
          %s1028 = sshll.u32 %s1018, 4
          %s1029 = int_to_ptr.vmem [resolvable:$true] %s1028
          %1034 = dma.vmem_to_hbm [thread:$0]  %s1029, 512, %s1027, %s1015, 128, 128, 8
        $region36: #{tpu_custom_call.1} parent=27 // pred_fallthru
          _
      $region28: #{tpu_custom_call.1} parent=5 // pred_fallthru
        _
      %p1035 = scmp.le.s32.totalorder 2, %s12
      // Predicated region
      $region37: #{tpu_custom_call.1} parent=5 // pred_check
        %p1036 = pneg %p1035
      $region38: #{tpu_custom_call.1} parent=5 // pred_check_branch
        %1038 = sbr.rel (%p1036) target = $region40
      $region39: #{tpu_custom_call.1} parent=5 // pred_region
        %s1039 = ssub.s32 %s12, 2
        // Predicated region
        $region41: #{tpu_custom_call.1} parent=39 // pred_check
          %p1040 = pneg %p88
        $region42: #{tpu_custom_call.1} parent=39 // pred_check_branch
          %1042 = sbr.rel (%p1040) target = $region44
        $region43: #{tpu_custom_call.1} parent=39 // pred_region
          %s1043 = sand.u32 %s73, 1
          %s1044 = scalar_lea.sflag [#allocation4], %s1043
          %s1045 = sand.u32 %s73, 1
          %s1046 = smul.addr %s1045, 32
          %s1047 = scalar_lea.vmem [#allocation5], %s1046
          %1048 = dma.done %s1044, 512
        $region44: #{tpu_custom_call.1} parent=39 // pred_fallthru
          _
      $region40: #{tpu_custom_call.1} parent=5 // pred_fallthru
        _
    $region6: #{tpu_custom_call.1} parent=1 // loop_footer
      %s16 = sadd.s32 1, %s12
    $region7: #{tpu_custom_call.1} parent=1 // loop_footer_branch
      %11 = sbr.rel target = $region3
    $region8: #{tpu_custom_call.1} parent=1 // loop_exit
      _
    %1049 = vsyncpa [#allocation3], 1
    %s1050 = scalar_lea.sflag [#allocation3], 1
    %1051 = vsyncpa %s1050, 1
    %1052 = vsyncpa [#allocation4], 1
    %s1053 = scalar_lea.sflag [#allocation4], 1
    %1054 = vsyncpa %s1053, 1

</llo_original>
